<compile_context>
chip_gen: v6e
topology: v6e:2x2x1
jax: 0.10.0
libtpu: 0.0.40
codegen_flags: <defaults>
</compile_context>

<pallas_src>
import functools

import jax
import jax.numpy as jnp
from jax import lax
from jax.experimental import pallas as pl
from jax.experimental.pallas import tpu as pltpu


# ---------------------------------------------------------------------------
# helpers
# ---------------------------------------------------------------------------

def _num_tensorcores_per_chip() -> int:
    """Best-effort TC-per-chip query (v7x has 2); defaults to 1."""
    try:
        kind = jax.devices()[0].device_kind.lower()
    except Exception:  # pragma: no cover - defensive
        return 1
    return 2 if "v7" in kind else 1


def _mxu_operand(x):
    # f32 / bf16 go to the MXU directly (f32 accumulate); anything else -> f32.
    if x.dtype in (jnp.float32, jnp.bfloat16):
        return x
    return x.astype(jnp.float32)


def _dw_block(trace, out_spike, scale):
    """delta_w tile = (-scale) * (out_spike^T @ trace).

    The sign AND scale are folded into the small [B, tile_out] operand
    (~2 vregs of VPU work) so there is no extra pass over the large
    [tile_out, tile_in] result.  The contraction is over the batch axis
    directly, so no transpose (XLU) is needed before the MXU.
    """
    lhs = _mxu_operand(out_spike)
    # Python-float scalar keeps the operand dtype (weak promotion).
    lhs = -lhs if scale == 1.0 else lhs * (-scale)
    return lax.dot_general(
        lhs, _mxu_operand(trace),
        dimension_numbers=(((0,), (0,)), ((), ())),   # contract batch axis
        preferred_element_type=jnp.float32)


# ---------------------------------------------------------------------------
# kernels
# ---------------------------------------------------------------------------

def _trace_kernel(in_ref, prev_ref, trace_ref, *, decay):
    """trace_pre = prev * (1 - 1/tau_pre) + in_spike   (f32 math)."""
    trace = (prev_ref[...].astype(jnp.float32) * decay
             + in_ref[...].astype(jnp.float32))
    trace_ref[...] = trace.astype(trace_ref.dtype)


def _dw_kernel(out_ref, trace_ref, dw_ref, *, scale):
    """delta_w tile from precomputed trace (used gridless and tiled)."""
    dw_ref[...] = _dw_block(trace_ref[...], out_ref[...], scale).astype(dw_ref.dtype)


def _fused_kernel(in_ref, out_ref, prev_ref, trace_ref, dw_ref, *, decay, scale):
    """Single-launch gridless path when trace_pre_prev is carried."""
    trace = (prev_ref[...].astype(jnp.float32) * decay
             + in_ref[...].astype(jnp.float32))
    trace_ref[...] = trace.astype(trace_ref.dtype)
    dw_ref[...] = _dw_block(trace, out_ref[...], scale).astype(dw_ref.dtype)


# ---------------------------------------------------------------------------
# wrapper
# ---------------------------------------------------------------------------

def anti_stdp_forward(in_spike, out_spike, trace_pre_prev=None, *,
                      tau_pre: float = 2.0, scale: float = 1.0,
                      tile_out=None, tile_in=None,
                      dw_dtype=jnp.float32):
    """Single-step anti-STDP update (what anti_STDP.forward actually executes).

    Returns (trace_pre, delta_w) with delta_w in nn.Linear weight layout
    [N_out, N_in].  `dw_dtype=jnp.bfloat16` halves the writeback (the kernel's
    roofline) if the downstream weight update tolerates bf16 gradients.
    """
    B, n_in = in_spike.shape
    b2, n_out = out_spike.shape
    assert b2 == B
    scale = float(scale)
    decay = 1.0 - 1.0 / float(tau_pre)
    has_prev = trace_pre_prev is not None

    dw_bytes = n_out * n_in * jnp.dtype(dw_dtype).itemsize
    forced_tiles = (tile_out is not None) or (tile_in is not None)

    # Generation-aware path selection:
    #   * multi-TC (v7x): tile early (~2 MiB) so the dominant delta_w writeback
    #     shards across both TensorCores.
    #   * single-TC (v5e/v6e): nothing substantial overlaps the writeback, so
    #     stay gridless up to ~8 MiB (fits the 16/32 MiB scoped VMEM defaults)
    #     and avoid per-step grid overhead.
    if not forced_tiles:
        threshold = (2 << 20) if _num_tensorcores_per_chip() >= 2 else (8 << 20)
        if dw_bytes > threshold:
            tile_out = min(n_out, 512)
            tile_in = min(n_in, 2048)    # ~4 MiB f32 dw tile, 8 MiB double-buffered
    use_tiled = (tile_out is not None) or (tile_in is not None)

    vmem = pl.BlockSpec(memory_space=pltpu.MemorySpace.VMEM)

    # ---------------- trace_pre -------------------------------------------
    if has_prev:
        if use_tiled:
            # Tiny [B, n_in] elementwise kernel, computed ONCE (hoisted out of
            # the dw grid so it is not recomputed per n_out tile).
            trace_pre = pl.pallas_call(
                functools.partial(_trace_kernel, decay=decay),
                out_shape=jax.ShapeDtypeStruct((B, n_in), in_spike.dtype),
                in_specs=[vmem, vmem],
                out_specs=vmem,
            )(in_spike, trace_pre_prev)
        else:
            trace_pre = None   # fused below
    else:
        # trace_prev == 0.0  =>  trace_pre == in_spike exactly: no kernel, no
        # zeros DMA, no dead math.
        trace_pre = in_spike

    # ---------------- gridless (small / medium delta_w) -------------------
    if not use_tiled:
        if has_prev:
            trace_pre, delta_w = pl.pallas_call(
                functools.partial(_fused_kernel, decay=decay, scale=scale),
                out_shape=(jax.ShapeDtypeStruct((B, n_in), in_spike.dtype),
                           jax.ShapeDtypeStruct((n_out, n_in), dw_dtype)),
                in_specs=[vmem, vmem, vmem],
                out_specs=(vmem, vmem),
            )(in_spike, out_spike, trace_pre_prev)
        else:
            delta_w = pl.pallas_call(
                functools.partial(_dw_kernel, scale=scale),
                out_shape=jax.ShapeDtypeStruct((n_out, n_in), dw_dtype),
                in_specs=[vmem, vmem],
                out_specs=vmem,
            )(out_spike, trace_pre)
        return trace_pre, delta_w

    # ---------------- tiled (large delta_w) -------------------------------
    tile_out = min(tile_out or 512, n_out)
    tile_in = min(tile_in or 2048, n_in)
    grid_out = pl.cdiv(n_out, tile_out)   # ragged last blocks allowed
    grid_in = pl.cdiv(n_in, tile_in)

    # Both axes are "parallel" (trace is precomputed, every dw tile is
    # independent).  Put the axis with more tiles first so the leading
    # parallel axis always has >=2 extent for v7x megacore sharding.
    if grid_in >= grid_out:
        grid = (grid_in, grid_out)
        out_map = lambda j, i: (0, i)        # out_spike  [B, n_out]
        trace_map = lambda j, i: (0, j)      # trace_pre  [B, n_in]
        dw_map = lambda j, i: (i, j)         # delta_w    [n_out, n_in]
    else:
        grid = (grid_out, grid_in)
        out_map = lambda i, j: (0, i)
        trace_map = lambda i, j: (0, j)
        dw_map = lambda i, j: (i, j)

    delta_w = pl.pallas_call(
        functools.partial(_dw_kernel, scale=scale),
        out_shape=jax.ShapeDtypeStruct((n_out, n_in), dw_dtype),
        grid=grid,
        in_specs=[pl.BlockSpec((B, tile_out), out_map),
                  pl.BlockSpec((B, tile_in), trace_map)],
        out_specs=pl.BlockSpec((tile_out, tile_in), dw_map),
        compiler_params=pltpu.CompilerParams(
            dimension_semantics=("parallel", "parallel")),
    )(out_spike, trace_pre)
    return trace_pre, delta_w


# ---------------------------------------------------------------------------
# self-test
# ---------------------------------------------------------------------------

if __name__ == "__main__":
    key = jax.random.PRNGKey(0)
    k1, k2, k3, k4, k5 = jax.random.split(key, 5)

    TAU_PRE = 2.0

    def ref_step(in_spike, out_spike, trace_prev, tau_pre, scale):
        tp = jnp.zeros_like(in_spike) if trace_prev is None else trace_prev
        trace = tp - tp / tau_pre + in_spike
        dw = -(trace[:, None, :] * out_spike[:, :, None]).sum(0)
        if scale != 1.0:
            dw = dw * scale
        return trace, dw

    # ---- Case 1: default forward() path (first recorded pair, trace_pre None),
    #      small nn.Linear synapse: batch=8, in=128, out=64, scale=1.0 (gridless).
    B, N_IN, N_OUT = 8, 128, 64
    in_spike = (jax.random.uniform(k1, (B, N_IN)) < 0.3).astype(jnp.float32)
    # OutputMonitor record carries a leading dim; forward() uses out_spike[0].
    out_spike_record = (jax.random.uniform(k2, (1, B, N_OUT)) < 0.3).astype(jnp.float32)
    out_spike = out_spike_record[0]

    trace1, dw1 = anti_stdp_forward(in_spike, out_spike, None,
                                    tau_pre=TAU_PRE, scale=1.0)
    jax.block_until_ready((trace1, dw1))
    rt1, rdw1 = ref_step(in_spike, out_spike, None, TAU_PRE, 1.0)
    assert trace1.shape == (B, N_IN) and dw1.shape == (N_OUT, N_IN)
    assert jnp.allclose(trace1, rt1, atol=1e-5)
    assert jnp.allclose(dw1, rdw1, atol=1e-4)

    # ---- Case 2: carried pre-trace and scale != 1.0 (gridless fused).
    trace_prev = 0.5 * (jax.random.uniform(k3, (B, N_IN)) < 0.5).astype(jnp.float32)
    trace2, dw2 = anti_stdp_forward(in_spike, out_spike, trace_prev,
                                    tau_pre=TAU_PRE, scale=0.5)
    jax.block_until_ready((trace2, dw2))
    rt2, rdw2 = ref_step(in_spike, out_spike, trace_prev, TAU_PRE, 0.5)
    assert jnp.allclose(trace2, rt2, atol=1e-5, rtol=1e-5)
    assert jnp.allclose(dw2, rdw2, atol=1e-4, rtol=1e-4)

    # ---- Case 3: tiled 2-D grid path (evenly dividing tiles), carried trace.
    N_IN3, N_OUT3 = 256, 256
    in3 = (jax.random.uniform(k4, (B, N_IN3)) < 0.3).astype(jnp.float32)
    out3 = (jax.random.uniform(k5, (B, N_OUT3)) < 0.3).astype(jnp.float32)
    prev3 = 0.5 * (jax.random.uniform(k3, (B, N_IN3)) < 0.5).astype(jnp.float32)
    trace3, dw3 = anti_stdp_forward(in3, out3, prev3, tau_pre=TAU_PRE, scale=1.0,
                                    tile_out=128, tile_in=128)
    jax.block_until_ready((trace3, dw3))
    rt3, rdw3 = ref_step(in3, out3, prev3, TAU_PRE, 1.0)
    assert jnp.allclose(trace3, rt3, atol=1e-5, rtol=1e-5)
    assert jnp.allclose(dw3, rdw3, atol=1e-4, rtol=1e-4)

    # ---- Case 4: tiled path with ragged (non-dividing) last blocks + scale.
    N_IN4, N_OUT4 = 384, 320
    in4 = (jax.random.uniform(k1, (B, N_IN4)) < 0.3).astype(jnp.float32)
    out4 = (jax.random.uniform(k2, (B, N_OUT4)) < 0.3).astype(jnp.float32)
    prev4 = 0.5 * (jax.random.uniform(k4, (B, N_IN4)) < 0.5).astype(jnp.float32)
    trace4, dw4 = anti_stdp_forward(in4, out4, prev4, tau_pre=TAU_PRE, scale=0.25,
                                    tile_out=128, tile_in=256)
    jax.block_until_ready((trace4, dw4))
    rt4, rdw4 = ref_step(in4, out4, prev4, TAU_PRE, 0.25)
    assert jnp.allclose(trace4, rt4, atol=1e-5, rtol=1e-5)
    assert jnp.allclose(dw4, rdw4, atol=1e-4, rtol=1e-4)

    # ---- Case 5: tiled path with trace_pre_prev=None (trace_pre == in_spike,
    #      no trace kernel launched).
    trace5, dw5 = anti_stdp_forward(in4, out4, None, tau_pre=TAU_PRE, scale=1.0,
                                    tile_out=128, tile_in=256)
    jax.block_until_ready((trace5, dw5))
    rt5, rdw5 = ref_step(in4, out4, None, TAU_PRE, 1.0)
    assert jnp.allclose(trace5, rt5, atol=1e-5)
    assert jnp.allclose(dw5, rdw5, atol=1e-4)

    # TODO(synk): monitor bookkeeping (record queues, enable/disable) and the
    # never-updated trace_post are host-side state with no Pallas equivalent;
    # only the numeric single-step update that forward() executes is kerneled.
    print("KERNEL_OK")
</pallas_src>

<mosaic_0001>
module attributes {stable_mosaic.version = 11 : i64} {
  func.func @_dw_kernel(%arg0: memref<8x64xf32, #tpu.memory_space<vmem>>, %arg1: memref<8x128xf32, #tpu.memory_space<vmem>>, %arg2: memref<64x128xf32, #tpu.memory_space<vmem>>) attributes {dimension_semantics = [], scalar_prefetch = 0 : i64, scratch_operands = 0 : i64, tpu.core_type = #tpu.core_type<tc>} {
    %c0 = arith.constant 0 : index
    %c0_0 = arith.constant 0 : index
    %0 = vector.load %arg1[%c0, %c0_0] : memref<8x128xf32, #tpu.memory_space<vmem>>, vector<8x128xf32>
    %c0_1 = arith.constant 0 : index
    %c0_2 = arith.constant 0 : index
    %1 = vector.load %arg0[%c0_1, %c0_2] : memref<8x64xf32, #tpu.memory_space<vmem>>, vector<8x64xf32>
    %cst = arith.constant 0.000000e+00 : f32
    %2 = vector.broadcast %cst : f32 to vector<8x64xf32>
    %3 = arith.subf %2, %1 : vector<8x64xf32>
    %cst_3 = arith.constant dense<0.000000e+00> : vector<64x128xf32>
    %4 = tpu.matmul %3, %0, %cst_3 {dimension_numbers = #tpu.dot_dimension_numbers<[0], [0], [1], [1], [0, 1, 1, 1], [], []>} : vector<8x64xf32>, vector<8x128xf32>, vector<64x128xf32> -> vector<64x128xf32>
    %c0_4 = arith.constant 0 : index
    %c0_5 = arith.constant 0 : index
    %5 = vector.load %arg2[%c0_4, %c0_5] : memref<64x128xf32, #tpu.memory_space<vmem>>, vector<64x128xf32>
    tpu.vector_store %arg2[%c0_4, %c0_5], %4 {strides = array<i32>} : memref<64x128xf32, #tpu.memory_space<vmem>>, vector<64x128xf32>,
    return
  }
}

</mosaic_0001>

<llo_original>
// kernel: tpu_custom_call.1
$region0: #{tpu_custom_call.1}
  #allocation0 [shape = 'u32[]', space=smem, size = 0x4, offset = 0x4, fixed_abs, tag = 'smem constant byte address 0x4 - core index']
  #allocation1 [shape = 'u32[144,128]{1,0:T(1,128)}', space=vmem, size = 0x12000, scoped, tag = 'internal scratch']
  %s0 = inlined_call_operand.hbm [shape: f32[8,64], index: 0, kind: input, shape index: {}]
  %s1 = inlined_call_operand.hbm [shape: f32[8,128], index: 1, kind: input, shape index: {}]
  %s2 = inlined_call_operand.hbm [shape: f32[64,128], index: 2, kind: output, shape index: {}]
  %s3 = sld [smem:[#allocation0]]
  $region26: #{tpu_custom_call.1} parent=0
    _
  %s5 = ssub.s32 1, %s3
  %s6 = scalar_select 0, %s5, %s3
  $region1: #{tpu_custom_call.1} parent=0
    #allocation2 [shape = 'u8[4096]{0}', space=vmem, size = 0x1000, scoped, tag = 'input window, operand 0, single buffered']
    #allocation3 [shape = 's32[1]{0}', space=sflag, size = 0x4, scoped, tag = 'scoped memory for tpu_custom_call.1']
    #allocation4 [shape = 's32[1]{0}', space=sflag, size = 0x4, scoped, tag = 'scoped memory for tpu_custom_call.1']
    #allocation5 [shape = 'u8[4096]{0}', space=vmem, size = 0x1000, scoped, tag = 'input window, operand 1, single buffered']
    #allocation6 [shape = 's32[1]{0}', space=sflag, size = 0x4, scoped, tag = 'scoped memory for tpu_custom_call.1']
    #allocation7 [shape = 'u8[32768]{0}', space=vmem, size = 0x8000, scoped, tag = 'output window, operand 0, single buffered']
    %7 = vsyncpa [#allocation3], 0
    %8 = vsyncpa [#allocation6], 0
    %9 = vsyncpa [#allocation4], 0
    // Predicated region
    $region2: #{tpu_custom_call.1} parent=1 // pred_check
      _
    $region3: #{tpu_custom_call.1} parent=1 // pred_check_branch
      %11 = sbr.rel (0) target = $region5
    $region4: #{tpu_custom_call.1} parent=1 // pred_region
      %s13 = ssub.s32 128, 128
      %14 = vsyncadd [#allocation3], %s13
      %s16 = sshll.u32 [#allocation2], 4
      %s17 = int_to_ptr.vmem [resolvable:$true] %s16
      %19 = dma.hbm_to_vmem [thread:$0]  %s0, 128, %s17, [#allocation3]
    $region5: #{tpu_custom_call.1} parent=1 // pred_fallthru
      _
    // Predicated region
    $region6: #{tpu_custom_call.1} parent=1 // pred_check
      _
    $region7: #{tpu_custom_call.1} parent=1 // pred_check_branch
      %21 = sbr.rel (0) target = $region9
    $region8: #{tpu_custom_call.1} parent=1 // pred_region
      %s23 = ssub.s32 128, 128
      %24 = vsyncadd [#allocation6], %s23
      %s26 = sshll.u32 [#allocation5], 4
      %s27 = int_to_ptr.vmem [resolvable:$true] %s26
      %29 = dma.hbm_to_vmem [thread:$0]  %s1, 128, %s27, [#allocation6]
    $region9: #{tpu_custom_call.1} parent=1 // pred_fallthru
      _
    // Predicated region
    $region10: #{tpu_custom_call.1} parent=1 // pred_check
      _
    $region11: #{tpu_custom_call.1} parent=1 // pred_check_branch
      %31 = sbr.rel (0) target = $region13
    $region12: #{tpu_custom_call.1} parent=1 // pred_region
      %32 = dma.done [#allocation3], 128
    $region13: #{tpu_custom_call.1} parent=1 // pred_fallthru
      _
    // Predicated region
    $region14: #{tpu_custom_call.1} parent=1 // pred_check
      _
    $region15: #{tpu_custom_call.1} parent=1 // pred_check_branch
      %34 = sbr.rel (0) target = $region17
    $region16: #{tpu_custom_call.1} parent=1 // pred_region
      %35 = dma.done [#allocation6], 128
    $region17: #{tpu_custom_call.1} parent=1 // pred_fallthru
      _
    %v36 = vld [vmem:[#allocation5] sm:$0xff]
    %v37 = vld [vmem:[#allocation2] sm:$0xff]
    %v38 = vsub.f32 0.0, %v37
    %39 = vxpose.xlu0.b32.start [1/16] %v38, 128
    %40 = vxpose.xlu0.b32.cont [2/16] 0.0, 128
    %41 = vxpose.xlu0.b32.cont [3/16] 0.0, 128
    %42 = vxpose.xlu0.b32.cont [4/16] 0.0, 128
    %43 = vxpose.xlu0.b32.cont [5/16] 0.0, 128
    %44 = vxpose.xlu0.b32.cont [6/16] 0.0, 128
    %45 = vxpose.xlu0.b32.cont [7/16] 0.0, 128
    %46 = vxpose.xlu0.b32.cont [8/16] 0.0, 128
    %47 = vxpose.xlu0.b32.cont [9/16] 0.0, 128
    %48 = vxpose.xlu0.b32.cont [10/16] 0.0, 128
    %49 = vxpose.xlu0.b32.cont [11/16] 0.0, 128
    %50 = vxpose.xlu0.b32.cont [12/16] 0.0, 128
    %51 = vxpose.xlu0.b32.cont [13/16] 0.0, 128
    %52 = vxpose.xlu0.b32.cont [14/16] 0.0, 128
    %53 = vxpose.xlu0.b32.cont [15/16] 0.0, 128
    %54 = vxpose.xlu0.b32.end [16/16] 0.0, 128
    %v55 = vpop.trf.xlu0
    %v56 = vpop.trf.xlu0
    %v57 = vpop.trf.xlu0
    %v58 = vpop.trf.xlu0
    %v59 = vpop.trf.xlu0
    %v60 = vpop.trf.xlu0
    %v61 = vpop.trf.xlu0
    %v62 = vpop.trf.xlu0
    %v63 = vpop.trf.xlu0
    %v64 = vpop.trf.xlu0
    %v65 = vpop.trf.xlu0
    %v66 = vpop.trf.xlu0
    %v67 = vpop.trf.xlu0
    %v68 = vpop.trf.xlu0
    %v69 = vpop.trf.xlu0
    %v70 = vpop.trf.xlu0
    %vm71 = vcmask 64512
    %v73 = vsel %vm71, %v55, 0
    %v76 = vsel %vm71, %v56, 0
    %v79 = vsel %vm71, %v57, 0
    %v82 = vsel %vm71, %v58, 0
    %v85 = vsel %vm71, %v59, 0
    %v88 = vsel %vm71, %v60, 0
    %v91 = vsel %vm71, %v61, 0
    %v94 = vsel %vm71, %v62, 0
    %96 = vmatprep.subr.mxu0 0.0
    %97 = vmatpush1.msra.mxu0 0.0
    %98 = vmatprep.subr.mxu0 0.0
    %99 = vmatpush1.msra.mxu0 0.0
    %100 = vmatprep.subr.mxu0 0.0
    %101 = vmatpush1.msra.mxu0 0.0
    %102 = vmatprep.subr.mxu0 0.0
    %103 = vmatpush1.msra.mxu0 0.0
    %104 = vmatprep.subr.mxu0 0.0
    %105 = vmatpush1.msra.mxu0 0.0
    %106 = vmatprep.subr.mxu0 0.0
    %107 = vmatpush1.msra.mxu0 0.0
    %108 = vmatprep.subr.mxu0 0.0
    %109 = vmatpush1.msra.mxu0 0.0
    %110 = vmatprep.subr.mxu0 0.0
    %111 = vmatpush1.msra.mxu0 0.0
    %112 = vmatprep.subr.mxu0 0.0
    %113 = vmatpush1.msra.mxu0 0.0
    %114 = vmatprep.subr.mxu0 0.0
    %115 = vmatpush1.msra.mxu0 0.0
    %116 = vmatprep.subr.mxu0 0.0
    %117 = vmatpush1.msra.mxu0 0.0
    %118 = vmatprep.subr.mxu0 0.0
    %119 = vmatpush1.msra.mxu0 0.0
    %120 = vmatprep.subr.mxu0 0.0
    %121 = vmatpush1.msra.mxu0 0.0
    %122 = vmatprep.subr.mxu0 0.0
    %123 = vmatpush1.msra.mxu0 0.0
    %124 = vmatprep.subr.mxu0 0.0
    %125 = vmatpush1.msra.mxu0 0.0
    %126 = vmatprep.subr.mxu0 0.0
    %127 = vmatpush1.msra.mxu0 %v36
    %128 = vmatprep.subr.mxu0 0.0
    %129 = vmatpush2.msra.mxu0 0.0
    %130 = vmatprep.subr.mxu0 0.0
    %131 = vmatpush2.msra.mxu0 0.0
    %132 = vmatprep.subr.mxu0 0.0
    %133 = vmatpush2.msra.mxu0 0.0
    %134 = vmatprep.subr.mxu0 0.0
    %135 = vmatpush2.msra.mxu0 0.0
    %136 = vmatprep.subr.mxu0 0.0
    %137 = vmatpush2.msra.mxu0 0.0
    %138 = vmatprep.subr.mxu0 0.0
    %139 = vmatpush2.msra.mxu0 0.0
    %140 = vmatprep.subr.mxu0 0.0
    %141 = vmatpush2.msra.mxu0 0.0
    %142 = vmatprep.subr.mxu0 0.0
    %143 = vmatpush2.msra.mxu0 0.0
    %144 = vmatprep.subr.mxu0 0.0
    %145 = vmatpush2.msra.mxu0 0.0
    %146 = vmatprep.subr.mxu0 0.0
    %147 = vmatpush2.msra.mxu0 0.0
    %148 = vmatprep.subr.mxu0 0.0
    %149 = vmatpush2.msra.mxu0 0.0
    %150 = vmatprep.subr.mxu0 0.0
    %151 = vmatpush2.msra.mxu0 0.0
    %152 = vmatprep.subr.mxu0 0.0
    %153 = vmatpush2.msra.mxu0 0.0
    %154 = vmatprep.subr.mxu0 0.0
    %155 = vmatpush2.msra.mxu0 0.0
    %156 = vmatprep.subr.mxu0 0.0
    %157 = vmatpush2.msra.mxu0 0.0
    %158 = vmatprep.subr.mxu0 0.0
    %159 = vmatpush2.msra.mxu0 0.0
    %160 = vmatprep.mubr.f32.mxu0 0.0
    %161 = vmatmul.mubr.f32.gmra.mxu0 %v73
    %v162 = vpop.f32.mrf.mxu0
    %v163 = vadd.f32 0.0, %v162
    %v164 = vpop.f32.mrf.mxu0
    %165 = vmatprep.mubr.f32.mxu0 0.0
    %166 = vmatmul.mubr.f32.gmra.mxu0 %v76
    %v167 = vpop.f32.mrf.mxu0
    %v168 = vadd.f32 0.0, %v167
    %v169 = vpop.f32.mrf.mxu0
    %170 = vmatprep.mubr.f32.mxu0 0.0
    %171 = vmatmul.mubr.f32.gmra.mxu0 %v79
    %v172 = vpop.f32.mrf.mxu0
    %v173 = vadd.f32 0.0, %v172
    %v174 = vpop.f32.mrf.mxu0
    %175 = vmatprep.mubr.f32.mxu0 0.0
    %176 = vmatmul.mubr.f32.gmra.mxu0 %v82
    %v177 = vpop.f32.mrf.mxu0
    %v178 = vadd.f32 0.0, %v177
    %v179 = vpop.f32.mrf.mxu0
    %180 = vmatprep.mubr.f32.mxu0 0.0
    %181 = vmatmul.mubr.f32.gmra.mxu0 %v85
    %v182 = vpop.f32.mrf.mxu0
    %v183 = vadd.f32 0.0, %v182
    %v184 = vpop.f32.mrf.mxu0
    %185 = vmatprep.mubr.f32.mxu0 0.0
    %186 = vmatmul.mubr.f32.gmra.mxu0 %v88
    %v187 = vpop.f32.mrf.mxu0
    %v188 = vadd.f32 0.0, %v187
    %v189 = vpop.f32.mrf.mxu0
    %190 = vmatprep.mubr.f32.mxu0 0.0
    %191 = vmatmul.mubr.f32.gmra.mxu0 %v91
    %v192 = vpop.f32.mrf.mxu0
    %v193 = vadd.f32 0.0, %v192
    %v194 = vpop.f32.mrf.mxu0
    %195 = vmatprep.mubr.f32.mxu0 0.0
    %196 = vmatmul.mubr.f32.gmra.mxu0 %v94
    %v197 = vpop.f32.mrf.mxu0
    %v198 = vadd.f32 0.0, %v197
    %v199 = vpop.f32.mrf.mxu0
    %200 = vdwg.mxu0
    %201 = vst [vmem:[#allocation7] sm:$0xff] %v163
    %202 = vst [vmem:[#allocation7 + $0x8] sm:$0xff] %v168
    %203 = vst [vmem:[#allocation7 + $0x10] sm:$0xff] %v173
    %204 = vst [vmem:[#allocation7 + $0x18] sm:$0xff] %v178
    %205 = vst [vmem:[#allocation7 + $0x20] sm:$0xff] %v183
    %206 = vst [vmem:[#allocation7 + $0x28] sm:$0xff] %v188
    %207 = vst [vmem:[#allocation7 + $0x30] sm:$0xff] %v193
    %208 = vst [vmem:[#allocation7 + $0x38] sm:$0xff] %v198
    // Predicated region
    $region18: #{tpu_custom_call.1} parent=1 // pred_check
      _
    $region19: #{tpu_custom_call.1} parent=1 // pred_check_branch
      %210 = sbr.rel (0) target = $region21
    $region20: #{tpu_custom_call.1} parent=1 // pred_region
      %s212 = ssub.s32 1024, 1024
      %213 = vsyncadd [#allocation4], %s212
      %s214 = sshll.u32 [#allocation7], 4
      %s215 = int_to_ptr.vmem [resolvable:$true] %s214
      %220 = dma.vmem_to_hbm [thread:$0]  %s215, 1024, %s2, [#allocation4], 128, 128, 8
    $region21: #{tpu_custom_call.1} parent=1 // pred_fallthru
      _
    // Predicated region
    $region22: #{tpu_custom_call.1} parent=1 // pred_check
      _
    $region23: #{tpu_custom_call.1} parent=1 // pred_check_branch
      %222 = sbr.rel (0) target = $region25
    $region24: #{tpu_custom_call.1} parent=1 // pred_region
      %223 = dma.done [#allocation4], 1024
    $region25: #{tpu_custom_call.1} parent=1 // pred_fallthru
      _
    %224 = vsyncpa [#allocation3], 1
    %225 = vsyncpa [#allocation6], 1
    %226 = vsyncpa [#allocation4], 1

</llo_original>
